<compile_context>
chip_gen: v6e
topology: v6e:2x2x1
jax: 0.10.0
libtpu: 0.0.40
codegen_flags: <defaults>
</compile_context>

<pallas_src>
import jax
import jax.numpy as jnp
from jax import lax
from jax.experimental import pallas as pl
from jax.experimental.pallas import tpu as pltpu

LN_EPS = 1e-5
MM_DTYPE = jnp.bfloat16     # matmul operand dtype (accumulation is f32)
LANE = 128


def _round_up(n, m):
    return (n + m - 1) // m * m


def _pad_to(a, shape):
    pads = [(0, t - s) for s, t in zip(a.shape, shape)]
    return jnp.pad(a, pads)


def _vmem():
    return pl.BlockSpec(memory_space=pltpu.MemorySpace.VMEM)


# ----------------------------- fused Pallas kernel ---------------------------

def _make_fused_kernel(B, S, O, OP, HP, HID):
    """Kernel body with static shape constants baked in via closure."""
    inv_o = 1.0 / float(O)
    BS = B * S

    def layer_norm_tanh(z, gamma_b, beta_b):
        # Padded lanes of z are exactly zero, so lane sums over the 128-wide
        # padded axis equal sums over the O valid lanes; divide by the true O.
        # Single XLU reduction for both sum(z) and sum(z*z): concat along the
        # sublane axis (S is a multiple of 8 -> layout preserving).
        zz = jnp.concatenate([z, z * z], axis=-2)               # (B, 2S, OP)
        sums = jnp.sum(zz, axis=-1, keepdims=True) * inv_o      # (B, 2S, 1)
        mean = sums[:, :S, :]
        msq = sums[:, S:, :]
        var = jnp.maximum(msq - mean * mean, 0.0)               # clamp 1-pass var
        zn = (z - mean) * lax.rsqrt(var + LN_EPS)
        # Padded gamma/beta are zero -> padded output lanes stay exactly 0.
        return jnp.tanh(zn * gamma_b + beta_b)

    def kernel(lhs_ref,
               w_l1fc_ref, bias1_ref, g1_ref, be1_ref,
               w_md_ref, bias_m_ref, gm_ref, bem_ref,
               b1_ref, w2_ref, b2_ref,
               pred_ref, hn_ref):
        # ---- One block-diagonal matmul covers both the L1 cell's x@Win1 and
        #      the MLP head's x_fc@W1 (single MXU issue, K=N=256). ----
        comb = jnp.dot(lhs_ref[...].astype(MM_DTYPE), w_l1fc_ref[...],
                       preferred_element_type=jnp.float32)      # (BS+B, OP+HP)

        # ---- MLP head tail (depends only on x): finish it first. ----
        hdd = jnp.maximum(comb[BS:BS + B, OP:OP + HP] + b1_ref[...], 0.0)
        pred = jnp.dot(hdd.astype(MM_DTYPE), w2_ref[...],
                       preferred_element_type=jnp.float32) + b2_ref[...]
        pred_ref[...] = pred.astype(pred_ref.dtype)

        # ---- Cell L1: h0 == 0, so h @ Wmem is just bmem (pre-summed into
        #      bias1 in pack_params). ----
        g1_b = jnp.broadcast_to(g1_ref[...].reshape(1, 1, OP), (B, S, OP))
        be1_b = jnp.broadcast_to(be1_ref[...].reshape(1, 1, OP), (B, S, OP))
        z1 = comb[0:BS, 0:OP].reshape(B, S, OP) + bias1_ref[...]
        y = layer_norm_tanh(z1, g1_b, be1_b)                    # (B,S,OP) f32
        h = y[:, S - 1, :]                                      # (B,OP)

        # ---- (hid-1) md cells: shared weights, loaded once; biases / LN
        #      affines pre-broadcast once (hoisted out of the unrolled loop).
        w_md = w_md_ref[...]                                    # (2*OP, OP) bf16
        bias_mb = jnp.broadcast_to(bias_m_ref[...].reshape(1, 1, OP), (B, S, OP))
        gm_b = jnp.broadcast_to(gm_ref[...].reshape(1, 1, OP), (B, S, OP))
        bem_b = jnp.broadcast_to(bem_ref[...].reshape(1, 1, OP), (B, S, OP))

        # HID is small (3) -> static unroll.
        # TODO(synk): for large HID switch to lax.fori_loop with a small unroll
        # factor and per-step hn stores to bound vreg live ranges.
        h_list = [h]
        for _ in range(1, HID):
            hb = jnp.broadcast_to(h.reshape(B, 1, OP), (B, S, OP)).reshape(BS, OP)
            # K-stacked matmul: [y | h] @ [Win; Wmem]  (one MXU issue, K=256).
            lhs = jnp.concatenate([y.reshape(BS, OP), hb], axis=-1)
            z = jnp.dot(lhs.astype(MM_DTYPE), w_md,
                        preferred_element_type=jnp.float32).reshape(B, S, OP)
            z = z + bias_mb
            y = layer_norm_tanh(z, gm_b, bem_b)
            h = y[:, S - 1, :]
            h_list.append(h)

        # Single dense store of all per-layer h states: (hid*B, OP).
        hn_ref[...] = jnp.concatenate(h_list, axis=0).astype(hn_ref.dtype)

    return kernel


# --------------------------- parameter packing / wrapper ---------------------

def init_params(key, in_sz, out_sz, hid):
    """Deterministic init mirroring the PyTorch module shapes (weights stored
    as (in_features, out_features)). md's (hid-1) cells are deepcopies of one
    cell -> identical weights, so a single shared cell_md is kept."""
    def linear(key, fan_in, fan_out):
        k1, k2 = jax.random.split(key)
        bound = 1.0 / jnp.sqrt(fan_in)
        w = jax.random.uniform(k1, (fan_in, fan_out), jnp.float32, -bound, bound)
        b = jax.random.uniform(k2, (1, fan_out), jnp.float32, -bound, bound)
        return w, b

    def cell(key, i_sz, o_sz):
        k1, k2 = jax.random.split(key)
        win, bin_ = linear(k1, i_sz, o_sz)
        wmem, bmem = linear(k2, o_sz, o_sz)
        return dict(win=win, bin=bin_, wmem=wmem, bmem=bmem,
                    gamma=jnp.ones((1, o_sz), jnp.float32),
                    beta=jnp.zeros((1, o_sz), jnp.float32))

    k1, k2, k3, k4 = jax.random.split(key, 4)
    out2_sz = out_sz * (hid + 1)
    w1, b1 = linear(k3, out2_sz, 64)
    w2, b2 = linear(k4, 64, out_sz - 1)
    return dict(cell_L1=cell(k1, in_sz, out_sz),
                cell_md=cell(k2, out_sz, out_sz),    # shared by all md layers
                fc=dict(w1=w1, b1=b1, w2=w2, b2=b2))


def pack_params(params, in_sz, out_sz, hid, seq):
    """Zero-pad every feature axis up to 128 lanes, pre-fuse weights, and cast
    matmul weights to bf16 (biases / LN affine stay f32). Done once.

    IMPORTANT invariant: all padded rows/columns/lanes of every packed tensor
    (weights, biases, gamma, beta) are EXACTLY ZERO.  The in-kernel LayerNorm
    divides lane sums over the padded 128-lane axis by the true out_sz, which
    is only correct because padded lanes of z stay exactly zero."""
    IP = _round_up(in_sz, LANE)
    OP = _round_up(out_sz, LANE)
    FP = _round_up(seq * in_sz, LANE)
    HP = _round_up(64, LANE)
    PP = _round_up(out_sz - 1, LANE)
    c1, cm, fc = params["cell_L1"], params["cell_md"], params["fc"]

    # Block-diagonal weight for (L1 wx) ⊕ (MLP first layer): (IP+FP, OP+HP).
    w_l1fc = jnp.zeros((IP + FP, OP + HP), jnp.float32)
    w_l1fc = w_l1fc.at[:IP, :OP].set(_pad_to(c1["win"], (IP, OP)))
    w_l1fc = w_l1fc.at[IP:, OP:].set(_pad_to(fc["w1"], (FP, HP)))

    # K-stacked md weights [Win; Wmem]: (2*OP, OP).
    w_md = jnp.concatenate([_pad_to(cm["win"], (OP, OP)),
                            _pad_to(cm["wmem"], (OP, OP))], axis=0)

    packed = (
        w_l1fc.astype(MM_DTYPE),
        _pad_to(c1["bin"] + c1["bmem"], (1, OP)),   # L1: h0 == 0 -> Wh == bmem
        _pad_to(c1["gamma"], (1, OP)),
        _pad_to(c1["beta"], (1, OP)),
        w_md.astype(MM_DTYPE),
        _pad_to(cm["bin"] + cm["bmem"], (1, OP)),   # pre-summed md biases
        _pad_to(cm["gamma"], (1, OP)),
        _pad_to(cm["beta"], (1, OP)),
        _pad_to(fc["b1"], (1, HP)),
        _pad_to(fc["w2"], (HP, PP)).astype(MM_DTYPE),
        _pad_to(fc["b2"], (1, PP)),
    )
    dims = dict(IP=IP, OP=OP, FP=FP, HP=HP, PP=PP)
    return packed, dims


def build_m01(params, in_sz, out_sz, hid, seq):
    """Returns a jitted forward(x) computing (pred (B,out_sz-1), hn (hid,B,out_sz))."""
    packed, d = pack_params(params, in_sz, out_sz, hid, seq)
    IP, OP, FP, HP, PP = d["IP"], d["OP"], d["FP"], d["HP"], d["PP"]

    @jax.jit
    def forward(x):
        B, S, I = x.shape
        BS = B * S
        kernel = _make_fused_kernel(B, S, out_sz, OP, HP, hid)

        # Block-diag-packed activation: rows [0:BS] carry the flattened cell
        # input in lanes [0:IP]; rows [BS:BS+B] carry the MLP-head input in
        # lanes [IP:IP+FP].  Off-blocks are zero -> the single block-diagonal
        # matmul in the kernel reproduces both original matmuls exactly.
        lhs = jnp.zeros((BS + B, IP + FP), jnp.float32)
        lhs = lhs.at[:BS, :I].set(x.reshape(BS, I))
        lhs = lhs.at[BS:, IP:IP + S * I].set(x.reshape(B, S * I))

        pred_pad, hn_pad = pl.pallas_call(
            kernel,
            out_shape=(jax.ShapeDtypeStruct((B, PP), jnp.float32),
                       jax.ShapeDtypeStruct((hid * B, OP), jnp.float32)),
            in_specs=[_vmem()] * (1 + len(packed)),
            out_specs=(_vmem(), _vmem()),
        )(lhs, *packed)

        hn = hn_pad.reshape(hid, B, OP)[:, :, :out_sz]
        return pred_pad[:, :out_sz - 1], hn

    return forward


# ---------------------------- pure-JAX reference -----------------------------
# Mirrors the kernel's bf16-operand / f32-accumulate matmuls so the check is
# tight; everything else is the straight PyTorch-equivalent f32 math.

def _mm_ref(a, w):
    return jnp.dot(a.astype(MM_DTYPE), w.astype(MM_DTYPE),
                   preferred_element_type=jnp.float32)


def _cell_ref(x, h, p, h_is_zero):
    B, S, I = x.shape
    O = p["win"].shape[1]
    wx = _mm_ref(x.reshape(B * S, I), p["win"]).reshape(B, S, O) + p["bin"]
    if h_is_zero:
        wh = p["bmem"]                  # 0 @ Wmem + bmem == bmem (exact)
    else:
        wh = _mm_ref(h, p["wmem"]) + p["bmem"]
    z = wx + wh.reshape(-1, 1, O)
    mean = z.mean(-1, keepdims=True)
    var = ((z - mean) ** 2).mean(-1, keepdims=True)
    zn = (z - mean) * lax.rsqrt(var + LN_EPS) * p["gamma"] + p["beta"]
    y = jnp.tanh(zn)
    return y, y[:, -1, :]


def _m01_ref(x, params, hid, out_sz):
    bz = x.shape[0]
    h = jnp.zeros((bz, out_sz), jnp.float32)
    y, h = _cell_ref(x, h, params["cell_L1"], True)
    hns = [h]
    for _ in range(hid - 1):
        y, h = _cell_ref(y, h, params["cell_md"], False)
        hns.append(h)
    hn = jnp.stack(hns, axis=0)
    fc = params["fc"]
    inn = x.reshape(bz, -1)
    hdd = jnp.maximum(_mm_ref(inn, fc["w1"]) + fc["b1"], 0.0)
    pred = _mm_ref(hdd, fc["w2"]) + fc["b2"]
    return pred, hn


# ---------------------------------- main --------------------------------------

if __name__ == "__main__":
    # Shapes consistent with the module's constraint: seq*in_sz == out_sz*(hid+1)
    bz, seq, in_sz, out_sz, hid = 2, 8, 16, 32, 3     # 8*16 == 32*(3+1) == 128
    assert seq * in_sz == out_sz * (hid + 1)

    key = jax.random.PRNGKey(0)
    kp, kx = jax.random.split(key)
    params = init_params(kp, in_sz, out_sz, hid)
    x = jax.random.normal(kx, (bz, seq, in_sz), jnp.float32)

    forward = build_m01(params, in_sz, out_sz, hid, seq)
    pred, hn = forward(x)
    jax.block_until_ready((pred, hn))

    # sanity check against the plain-JAX reference
    pred_r, hn_r = _m01_ref(x, params, hid, out_sz)
    assert pred.shape == (bz, out_sz - 1) and hn.shape == (hid, bz, out_sz)
    assert jnp.allclose(pred, pred_r, atol=1e-3, rtol=1e-3), \
        float(jnp.max(jnp.abs(pred - pred_r)))
    assert jnp.allclose(hn, hn_r, atol=1e-3, rtol=1e-3), \
        float(jnp.max(jnp.abs(hn - hn_r)))

    print("KERNEL_OK")
</pallas_src>

<mosaic_0001>
module attributes {stable_mosaic.version = 11 : i64} {
  func.func @kernel(%arg0: memref<18x256xf32, #tpu.memory_space<vmem>>, %arg1: memref<256x256xbf16, #tpu.memory_space<vmem>>, %arg2: memref<1x128xf32, #tpu.memory_space<vmem>>, %arg3: memref<1x128xf32, #tpu.memory_space<vmem>>, %arg4: memref<1x128xf32, #tpu.memory_space<vmem>>, %arg5: memref<256x128xbf16, #tpu.memory_space<vmem>>, %arg6: memref<1x128xf32, #tpu.memory_space<vmem>>, %arg7: memref<1x128xf32, #tpu.memory_space<vmem>>, %arg8: memref<1x128xf32, #tpu.memory_space<vmem>>, %arg9: memref<1x128xf32, #tpu.memory_space<vmem>>, %arg10: memref<128x128xbf16, #tpu.memory_space<vmem>>, %arg11: memref<1x128xf32, #tpu.memory_space<vmem>>, %arg12: memref<2x128xf32, #tpu.memory_space<vmem>>, %arg13: memref<6x128xf32, #tpu.memory_space<vmem>>) attributes {dimension_semantics = [], scalar_prefetch = 0 : i64, scratch_operands = 0 : i64, tpu.core_type = #tpu.core_type<tc>} {
    %c0 = arith.constant 0 : index
    %c0_0 = arith.constant 0 : index
    %0 = vector.load %arg0[%c0, %c0_0] : memref<18x256xf32, #tpu.memory_space<vmem>>, vector<18x256xf32>
    %1 = arith.truncf %0 : vector<18x256xf32> to vector<18x256xbf16>
    %c0_1 = arith.constant 0 : index
    %c0_2 = arith.constant 0 : index
    %2 = vector.load %arg1[%c0_1, %c0_2] : memref<256x256xbf16, #tpu.memory_space<vmem>>, vector<256x256xbf16>
    %cst = arith.constant dense<0.000000e+00> : vector<18x256xf32>
    %3 = tpu.matmul %1, %2, %cst {dimension_numbers = #tpu.dot_dimension_numbers<[1], [0], [0], [1], [0, 0, 1, 1], [], []>} : vector<18x256xbf16>, vector<256x256xbf16>, vector<18x256xf32> -> vector<18x256xf32>
    %4 = vector.extract_strided_slice %3 {offsets = [16, 128], sizes = [2, 128], strides = [1, 1]} : vector<18x256xf32> to vector<2x128xf32>
    %c0_3 = arith.constant 0 : index
    %c0_4 = arith.constant 0 : index
    %5 = vector.load %arg9[%c0_3, %c0_4] : memref<1x128xf32, #tpu.memory_space<vmem>>, vector<1x128xf32>
    %6 = vector.broadcast %5 : vector<1x128xf32> to vector<2x128xf32>
    %7 = arith.addf %4, %6 : vector<2x128xf32>
    %cst_5 = arith.constant 0.000000e+00 : f32
    %8 = vector.broadcast %cst_5 : f32 to vector<2x128xf32>
    %9 = arith.maximumf %7, %8 : vector<2x128xf32>
    %10 = arith.truncf %9 : vector<2x128xf32> to vector<2x128xbf16>
    %c0_6 = arith.constant 0 : index
    %c0_7 = arith.constant 0 : index
    %11 = vector.load %arg10[%c0_6, %c0_7] : memref<128x128xbf16, #tpu.memory_space<vmem>>, vector<128x128xbf16>
    %cst_8 = arith.constant dense<0.000000e+00> : vector<2x128xf32>
    %12 = tpu.matmul %10, %11, %cst_8 {dimension_numbers = #tpu.dot_dimension_numbers<[1], [0], [0], [1], [0, 0, 1, 1], [], []>} : vector<2x128xbf16>, vector<128x128xbf16>, vector<2x128xf32> -> vector<2x128xf32>
    %c0_9 = arith.constant 0 : index
    %c0_10 = arith.constant 0 : index
    %13 = vector.load %arg11[%c0_9, %c0_10] : memref<1x128xf32, #tpu.memory_space<vmem>>, vector<1x128xf32>
    %14 = vector.broadcast %13 : vector<1x128xf32> to vector<2x128xf32>
    %15 = arith.addf %12, %14 : vector<2x128xf32>
    %c0_11 = arith.constant 0 : index
    %c0_12 = arith.constant 0 : index
    %16 = vector.load %arg12[%c0_11, %c0_12] : memref<2x128xf32, #tpu.memory_space<vmem>>, vector<2x128xf32>
    tpu.vector_store %arg12[%c0_11, %c0_12], %15 {strides = array<i32>} : memref<2x128xf32, #tpu.memory_space<vmem>>, vector<2x128xf32>,
    %c0_13 = arith.constant 0 : index
    %c0_14 = arith.constant 0 : index
    %17 = vector.load %arg3[%c0_13, %c0_14] : memref<1x128xf32, #tpu.memory_space<vmem>>, vector<1x128xf32>
    %18 = vector.shape_cast %17 : vector<1x128xf32> to vector<1x1x128xf32>
    %19 = vector.shape_cast %18 : vector<1x1x128xf32> to vector<1x1x128xf32>
    %20 = vector.broadcast %19 : vector<1x1x128xf32> to vector<2x8x128xf32>
    %c0_15 = arith.constant 0 : index
    %c0_16 = arith.constant 0 : index
    %21 = vector.load %arg4[%c0_15, %c0_16] : memref<1x128xf32, #tpu.memory_space<vmem>>, vector<1x128xf32>
    %22 = vector.shape_cast %21 : vector<1x128xf32> to vector<1x1x128xf32>
    %23 = vector.shape_cast %22 : vector<1x1x128xf32> to vector<1x1x128xf32>
    %24 = vector.broadcast %23 : vector<1x1x128xf32> to vector<2x8x128xf32>
    %25 = vector.extract_strided_slice %3 {offsets = [0, 0], sizes = [16, 128], strides = [1, 1]} : vector<18x256xf32> to vector<16x128xf32>
    %26 = vector.shape_cast %25 : vector<16x128xf32> to vector<2x8x128xf32>
    %c0_17 = arith.constant 0 : index
    %c0_18 = arith.constant 0 : index
    %27 = vector.load %arg2[%c0_17, %c0_18] : memref<1x128xf32, #tpu.memory_space<vmem>>, vector<1x128xf32>
    %28 = vector.shape_cast %27 : vector<1x128xf32> to vector<1x1x128xf32>
    %29 = vector.broadcast %28 : vector<1x1x128xf32> to vector<2x8x128xf32>
    %30 = arith.addf %26, %29 : vector<2x8x128xf32>
    %31 = arith.mulf %30, %30 : vector<2x8x128xf32>
    %32 = tpu.concatenate %30, %31 in 1 : vector<2x8x128xf32>, vector<2x8x128xf32> -> vector<2x16x128xf32>
    %cst_19 = arith.constant dense<0.000000e+00> : vector<2x16xf32>
    %33 = vector.multi_reduction <add>, %32, %cst_19 [2] : vector<2x16x128xf32> to vector<2x16xf32>
    %34 = vector.shape_cast %33 : vector<2x16xf32> to vector<2x16x1xf32>
    %cst_20 = arith.constant 3.125000e-02 : f32
    %35 = vector.broadcast %cst_20 : f32 to vector<2x16x1xf32>
    %36 = arith.mulf %34, %35 : vector<2x16x1xf32>
    %37 = vector.extract_strided_slice %36 {offsets = [0, 0, 0], sizes = [2, 8, 1], strides = [1, 1, 1]} : vector<2x16x1xf32> to vector<2x8x1xf32>
    %38 = vector.extract_strided_slice %36 {offsets = [0, 8, 0], sizes = [2, 8, 1], strides = [1, 1, 1]} : vector<2x16x1xf32> to vector<2x8x1xf32>
    %39 = arith.mulf %37, %37 : vector<2x8x1xf32>
    %40 = arith.subf %38, %39 : vector<2x8x1xf32>
    %cst_21 = arith.constant 0.000000e+00 : f32
    %41 = vector.broadcast %cst_21 : f32 to vector<2x8x1xf32>
    %42 = arith.maximumf %40, %41 : vector<2x8x1xf32>
    %43 = vector.broadcast %37 : vector<2x8x1xf32> to vector<2x8x128xf32>
    %44 = arith.subf %30, %43 : vector<2x8x128xf32>
    %cst_22 = arith.constant 9.99999974E-6 : f32
    %45 = vector.broadcast %cst_22 : f32 to vector<2x8x1xf32>
    %46 = arith.addf %42, %45 : vector<2x8x1xf32>
    %47 = math.rsqrt %46 : vector<2x8x1xf32>
    %48 = vector.broadcast %47 : vector<2x8x1xf32> to vector<2x8x128xf32>
    %49 = arith.mulf %44, %48 : vector<2x8x128xf32>
    %50 = arith.mulf %49, %20 : vector<2x8x128xf32>
    %51 = arith.addf %50, %24 : vector<2x8x128xf32>
    %52 = math.tanh %51 : vector<2x8x128xf32>
    %53 = vector.extract_strided_slice %52 {offsets = [0, 7, 0], sizes = [2, 1, 128], strides = [1, 1, 1]} : vector<2x8x128xf32> to vector<2x1x128xf32>
    %54 = vector.shape_cast %53 : vector<2x1x128xf32> to vector<2x128xf32>
    %c0_23 = arith.constant 0 : index
    %c0_24 = arith.constant 0 : index
    %55 = vector.load %arg5[%c0_23, %c0_24] : memref<256x128xbf16, #tpu.memory_space<vmem>>, vector<256x128xbf16>
    %c0_25 = arith.constant 0 : index
    %c0_26 = arith.constant 0 : index
    %56 = vector.load %arg6[%c0_25, %c0_26] : memref<1x128xf32, #tpu.memory_space<vmem>>, vector<1x128xf32>
    %57 = vector.shape_cast %56 : vector<1x128xf32> to vector<1x1x128xf32>
    %58 = vector.shape_cast %57 : vector<1x1x128xf32> to vector<1x1x128xf32>
    %59 = vector.broadcast %58 : vector<1x1x128xf32> to vector<2x8x128xf32>
    %c0_27 = arith.constant 0 : index
    %c0_28 = arith.constant 0 : index
    %60 = vector.load %arg7[%c0_27, %c0_28] : memref<1x128xf32, #tpu.memory_space<vmem>>, vector<1x128xf32>
    %61 = vector.shape_cast %60 : vector<1x128xf32> to vector<1x1x128xf32>
    %62 = vector.shape_cast %61 : vector<1x1x128xf32> to vector<1x1x128xf32>
    %63 = vector.broadcast %62 : vector<1x1x128xf32> to vector<2x8x128xf32>
    %c0_29 = arith.constant 0 : index
    %c0_30 = arith.constant 0 : index
    %64 = vector.load %arg8[%c0_29, %c0_30] : memref<1x128xf32, #tpu.memory_space<vmem>>, vector<1x128xf32>
    %65 = vector.shape_cast %64 : vector<1x128xf32> to vector<1x1x128xf32>
    %66 = vector.shape_cast %65 : vector<1x1x128xf32> to vector<1x1x128xf32>
    %67 = vector.broadcast %66 : vector<1x1x128xf32> to vector<2x8x128xf32>
    %68 = vector.shape_cast %54 : vector<2x128xf32> to vector<2x1x128xf32>
    %69 = vector.shape_cast %68 : vector<2x1x128xf32> to vector<2x1x128xf32>
    %70 = vector.broadcast %69 : vector<2x1x128xf32> to vector<2x8x128xf32>
    %71 = vector.shape_cast %70 : vector<2x8x128xf32> to vector<16x128xf32>
    %72 = vector.shape_cast %52 : vector<2x8x128xf32> to vector<16x128xf32>
    %73 = tpu.concatenate %72, %71 in 1 : vector<16x128xf32>, vector<16x128xf32> -> vector<16x256xf32>
    %74 = arith.truncf %73 : vector<16x256xf32> to vector<16x256xbf16>
    %cst_31 = arith.constant dense<0.000000e+00> : vector<16x128xf32>
    %75 = tpu.matmul %74, %55, %cst_31 {dimension_numbers = #tpu.dot_dimension_numbers<[1], [0], [0], [1], [0, 0, 1, 1], [], []>} : vector<16x256xbf16>, vector<256x128xbf16>, vector<16x128xf32> -> vector<16x128xf32>
    %76 = vector.shape_cast %75 : vector<16x128xf32> to vector<2x8x128xf32>
    %77 = arith.addf %76, %59 : vector<2x8x128xf32>
    %78 = arith.mulf %77, %77 : vector<2x8x128xf32>
    %79 = tpu.concatenate %77, %78 in 1 : vector<2x8x128xf32>, vector<2x8x128xf32> -> vector<2x16x128xf32>
    %cst_32 = arith.constant dense<0.000000e+00> : vector<2x16xf32>
    %80 = vector.multi_reduction <add>, %79, %cst_32 [2] : vector<2x16x128xf32> to vector<2x16xf32>
    %81 = vector.shape_cast %80 : vector<2x16xf32> to vector<2x16x1xf32>
    %cst_33 = arith.constant 3.125000e-02 : f32
    %82 = vector.broadcast %cst_33 : f32 to vector<2x16x1xf32>
    %83 = arith.mulf %81, %82 : vector<2x16x1xf32>
    %84 = vector.extract_strided_slice %83 {offsets = [0, 0, 0], sizes = [2, 8, 1], strides = [1, 1, 1]} : vector<2x16x1xf32> to vector<2x8x1xf32>
    %85 = vector.extract_strided_slice %83 {offsets = [0, 8, 0], sizes = [2, 8, 1], strides = [1, 1, 1]} : vector<2x16x1xf32> to vector<2x8x1xf32>
    %86 = arith.mulf %84, %84 : vector<2x8x1xf32>
    %87 = arith.subf %85, %86 : vector<2x8x1xf32>
    %cst_34 = arith.constant 0.000000e+00 : f32
    %88 = vector.broadcast %cst_34 : f32 to vector<2x8x1xf32>
    %89 = arith.maximumf %87, %88 : vector<2x8x1xf32>
    %90 = vector.broadcast %84 : vector<2x8x1xf32> to vector<2x8x128xf32>
    %91 = arith.subf %77, %90 : vector<2x8x128xf32>
    %cst_35 = arith.constant 9.99999974E-6 : f32
    %92 = vector.broadcast %cst_35 : f32 to vector<2x8x1xf32>
    %93 = arith.addf %89, %92 : vector<2x8x1xf32>
    %94 = math.rsqrt %93 : vector<2x8x1xf32>
    %95 = vector.broadcast %94 : vector<2x8x1xf32> to vector<2x8x128xf32>
    %96 = arith.mulf %91, %95 : vector<2x8x128xf32>
    %97 = arith.mulf %96, %63 : vector<2x8x128xf32>
    %98 = arith.addf %97, %67 : vector<2x8x128xf32>
    %99 = math.tanh %98 : vector<2x8x128xf32>
    %100 = vector.extract_strided_slice %99 {offsets = [0, 7, 0], sizes = [2, 1, 128], strides = [1, 1, 1]} : vector<2x8x128xf32> to vector<2x1x128xf32>
    %101 = vector.shape_cast %100 : vector<2x1x128xf32> to vector<2x128xf32>
    %102 = vector.shape_cast %101 : vector<2x128xf32> to vector<2x1x128xf32>
    %103 = vector.shape_cast %102 : vector<2x1x128xf32> to vector<2x1x128xf32>
    %104 = vector.broadcast %103 : vector<2x1x128xf32> to vector<2x8x128xf32>
    %105 = vector.shape_cast %104 : vector<2x8x128xf32> to vector<16x128xf32>
    %106 = vector.shape_cast %99 : vector<2x8x128xf32> to vector<16x128xf32>
    %107 = tpu.concatenate %106, %105 in 1 : vector<16x128xf32>, vector<16x128xf32> -> vector<16x256xf32>
    %108 = arith.truncf %107 : vector<16x256xf32> to vector<16x256xbf16>
    %cst_36 = arith.constant dense<0.000000e+00> : vector<16x128xf32>
    %109 = tpu.matmul %108, %55, %cst_36 {dimension_numbers = #tpu.dot_dimension_numbers<[1], [0], [0], [1], [0, 0, 1, 1], [], []>} : vector<16x256xbf16>, vector<256x128xbf16>, vector<16x128xf32> -> vector<16x128xf32>
    %110 = vector.shape_cast %109 : vector<16x128xf32> to vector<2x8x128xf32>
    %111 = arith.addf %110, %59 : vector<2x8x128xf32>
    %112 = arith.mulf %111, %111 : vector<2x8x128xf32>
    %113 = tpu.concatenate %111, %112 in 1 : vector<2x8x128xf32>, vector<2x8x128xf32> -> vector<2x16x128xf32>
    %cst_37 = arith.constant dense<0.000000e+00> : vector<2x16xf32>
    %114 = vector.multi_reduction <add>, %113, %cst_37 [2] : vector<2x16x128xf32> to vector<2x16xf32>
    %115 = vector.shape_cast %114 : vector<2x16xf32> to vector<2x16x1xf32>
    %cst_38 = arith.constant 3.125000e-02 : f32
    %116 = vector.broadcast %cst_38 : f32 to vector<2x16x1xf32>
    %117 = arith.mulf %115, %116 : vector<2x16x1xf32>
    %118 = vector.extract_strided_slice %117 {offsets = [0, 0, 0], sizes = [2, 8, 1], strides = [1, 1, 1]} : vector<2x16x1xf32> to vector<2x8x1xf32>
    %119 = vector.extract_strided_slice %117 {offsets = [0, 8, 0], sizes = [2, 8, 1], strides = [1, 1, 1]} : vector<2x16x1xf32> to vector<2x8x1xf32>
    %120 = arith.mulf %118, %118 : vector<2x8x1xf32>
    %121 = arith.subf %119, %120 : vector<2x8x1xf32>
    %cst_39 = arith.constant 0.000000e+00 : f32
    %122 = vector.broadcast %cst_39 : f32 to vector<2x8x1xf32>
    %123 = arith.maximumf %121, %122 : vector<2x8x1xf32>
    %124 = vector.broadcast %118 : vector<2x8x1xf32> to vector<2x8x128xf32>
    %125 = arith.subf %111, %124 : vector<2x8x128xf32>
    %cst_40 = arith.constant 9.99999974E-6 : f32
    %126 = vector.broadcast %cst_40 : f32 to vector<2x8x1xf32>
    %127 = arith.addf %123, %126 : vector<2x8x1xf32>
    %128 = math.rsqrt %127 : vector<2x8x1xf32>
    %129 = vector.broadcast %128 : vector<2x8x1xf32> to vector<2x8x128xf32>
    %130 = arith.mulf %125, %129 : vector<2x8x128xf32>
    %131 = arith.mulf %130, %63 : vector<2x8x128xf32>
    %132 = arith.addf %131, %67 : vector<2x8x128xf32>
    %133 = math.tanh %132 : vector<2x8x128xf32>
    %134 = vector.extract_strided_slice %133 {offsets = [0, 7, 0], sizes = [2, 1, 128], strides = [1, 1, 1]} : vector<2x8x128xf32> to vector<2x1x128xf32>
    %135 = vector.shape_cast %134 : vector<2x1x128xf32> to vector<2x128xf32>
    %136 = tpu.concatenate %54, %101, %135 in 0 : vector<2x128xf32>, vector<2x128xf32>, vector<2x128xf32> -> vector<6x128xf32>
    %c0_41 = arith.constant 0 : index
    %c0_42 = arith.constant 0 : index
    %137 = vector.load %arg13[%c0_41, %c0_42] : memref<6x128xf32, #tpu.memory_space<vmem>>, vector<6x128xf32>
    tpu.vector_store %arg13[%c0_41, %c0_42], %136 {strides = array<i32>} : memref<6x128xf32, #tpu.memory_space<vmem>>, vector<6x128xf32>,
    return
  }
}

</mosaic_0001>

<llo_original>
// kernel: forward.1
$region0: #{forward.1}
  #allocation0 [shape = 'u32[]', space=smem, size = 0x4, offset = 0x4, fixed_abs, tag = 'smem constant byte address 0x4 - core index']
  #allocation1 [shape = 'u32[144,128]{1,0:T(1,128)}', space=vmem, size = 0x12000, scoped, tag = 'internal scratch']
  %s0 = inlined_call_operand.vmem [shape: f32[18,256], index: 0, kind: input, shape index: {}]
  %s1 = inlined_call_operand.hbm [shape: bf16[256,256], index: 1, kind: input, shape index: {}]
  %s2 = inlined_call_operand.vmem [shape: f32[1,128], index: 2, kind: input, shape index: {}]
  %s3 = inlined_call_operand.vmem [shape: f32[1,128], index: 3, kind: input, shape index: {}, may-alias: {3,7}]
  %s4 = inlined_call_operand.vmem [shape: f32[1,128], index: 4, kind: input, shape index: {}, may-alias: {4,8}]
  %s5 = inlined_call_operand.hbm [shape: bf16[256,128], index: 5, kind: input, shape index: {}]
  %s6 = inlined_call_operand.vmem [shape: f32[1,128], index: 6, kind: input, shape index: {}]
  %s7 = inlined_call_operand.vmem [shape: f32[1,128], index: 7, kind: input, shape index: {}, may-alias: {3,7}]
  %s8 = inlined_call_operand.vmem [shape: f32[1,128], index: 8, kind: input, shape index: {}, may-alias: {4,8}]
  %s9 = inlined_call_operand.vmem [shape: f32[1,128], index: 9, kind: input, shape index: {}]
  %s10 = inlined_call_operand.vmem [shape: bf16[128,128], index: 10, kind: input, shape index: {}]
  %s11 = inlined_call_operand.vmem [shape: f32[1,128], index: 11, kind: input, shape index: {}]
  %s12 = inlined_call_operand.hbm [shape: f32[2,128], index: 12, kind: output, shape index: {0}]
  %s13 = inlined_call_operand.vmem [shape: f32[6,128], index: 13, kind: output, shape index: {1}]
  %14 = xla_tuple %s12, %s13
  %s15 = sld [smem:[#allocation0]]
  $region74: #{forward.1} parent=0
    _
  %s17 = ssub.s32 1, %s15
  %s18 = scalar_select 0, %s17, %s15
  $region1: #{forward.1} parent=0
    #allocation2 [shape = 'u8[131072]{0}', space=vmem, size = 0x20000, scoped, tag = 'input window, operand 1, single buffered']
    #allocation3 [shape = 's32[1]{0}', space=sflag, size = 0x4, scoped, tag = 'scoped memory for forward.1']
    #allocation4 [shape = 's32[1]{0}', space=sflag, size = 0x4, scoped, tag = 'scoped memory for forward.1']
    #allocation5 [shape = 'u8[65536]{0}', space=vmem, size = 0x10000, scoped, tag = 'input window, operand 5, single buffered']
    #allocation6 [shape = 's32[1]{0}', space=sflag, size = 0x4, scoped, tag = 'scoped memory for forward.1']
    #allocation7 [shape = 'u8[1024]{0}', space=vmem, size = 0x400, scoped, tag = 'output window, operand 0, single buffered']
    %19 = vsyncpa [#allocation3], 0
    %20 = vsyncpa [#allocation6], 0
    %21 = vsyncpa [#allocation4], 0
    // Predicated region
    $region2: #{forward.1} parent=1 // pred_check
      _
    $region3: #{forward.1} parent=1 // pred_check_branch
      %23 = sbr.rel (0) target = $region5
    $region4: #{forward.1} parent=1 // pred_region
      _
    $region5: #{forward.1} parent=1 // pred_fallthru
      _
    // Predicated region
    $region6: #{forward.1} parent=1 // pred_check
      _
    $region7: #{forward.1} parent=1 // pred_check_branch
      %25 = sbr.rel (0) target = $region9
    $region8: #{forward.1} parent=1 // pred_region
      %s27 = ssub.s32 4096, 4096
      %28 = vsyncadd [#allocation3], %s27
      %s29 = sshll.u32 [#allocation2], 4
      %s30 = int_to_ptr.vmem [resolvable:$true] %s29
      %35 = dma.hbm_to_vmem [thread:$0]  %s1, 4096, %s30, [#allocation3], 128, 128, 8
    $region9: #{forward.1} parent=1 // pred_fallthru
      _
    // Predicated region
    $region10: #{forward.1} parent=1 // pred_check
      _
    $region11: #{forward.1} parent=1 // pred_check_branch
      %37 = sbr.rel (0) target = $region13
    $region12: #{forward.1} parent=1 // pred_region
      _
    $region13: #{forward.1} parent=1 // pred_fallthru
      _
    // Predicated region
    $region14: #{forward.1} parent=1 // pred_check
      _
    $region15: #{forward.1} parent=1 // pred_check_branch
      %39 = sbr.rel (0) target = $region17
    $region16: #{forward.1} parent=1 // pred_region
      _
    $region17: #{forward.1} parent=1 // pred_fallthru
      _
    // Predicated region
    $region18: #{forward.1} parent=1 // pred_check
      _
    $region19: #{forward.1} parent=1 // pred_check_branch
      %41 = sbr.rel (0) target = $region21
    $region20: #{forward.1} parent=1 // pred_region
      _
    $region21: #{forward.1} parent=1 // pred_fallthru
      _
    // Predicated region
    $region22: #{forward.1} parent=1 // pred_check
      _
    $region23: #{forward.1} parent=1 // pred_check_branch
      %43 = sbr.rel (0) target = $region25
    $region24: #{forward.1} parent=1 // pred_region
      %s45 = ssub.s32 2048, 2048
      %46 = vsyncadd [#allocation6], %s45
      %s47 = sshll.u32 [#allocation5], 4
      %s48 = int_to_ptr.vmem [resolvable:$true] %s47
      %53 = dma.hbm_to_vmem [thread:$0]  %s5, 2048, %s48, [#allocation6], 64, 64, 4
    $region25: #{forward.1} parent=1 // pred_fallthru
      _
    // Predicated region
    $region26: #{forward.1} parent=1 // pred_check
      _
    $region27: #{forward.1} parent=1 // pred_check_branch
      %55 = sbr.rel (0) target = $region29
    $region28: #{forward.1} parent=1 // pred_region
      _
    $region29: #{forward.1} parent=1 // pred_fallthru
      _
    // Predicated region
    $region30: #{forward.1} parent=1 // pred_check
      _
    $region31: #{forward.1} parent=1 // pred_check_branch
      %57 = sbr.rel (0) target = $region33
    $region32: #{forward.1} parent=1 // pred_region
      _
    $region33: #{forward.1} parent=1 // pred_fallthru
      _
    // Predicated region
    $region34: #{forward.1} parent=1 // pred_check
      _
    $region35: #{forward.1} parent=1 // pred_check_branch
      %59 = sbr.rel (0) target = $region37
    $region36: #{forward.1} parent=1 // pred_region
      _
    $region37: #{forward.1} parent=1 // pred_fallthru
      _
    // Predicated region
    $region38: #{forward.1} parent=1 // pred_check
      _
    $region39: #{forward.1} parent=1 // pred_check_branch
      %61 = sbr.rel (0) target = $region41
    $region40: #{forward.1} parent=1 // pred_region
      _
    $region41: #{forward.1} parent=1 // pred_fallthru
      _
    // Predicated region
    $region42: #{forward.1} parent=1 // pred_check
      _
    $region43: #{forward.1} parent=1 // pred_check_branch
      %63 = sbr.rel (0) target = $region45
    $region44: #{forward.1} parent=1 // pred_region
      _
    $region45: #{forward.1} parent=1 // pred_fallthru
      _
    // Predicated region
    $region46: #{forward.1} parent=1 // pred_check
      _
    $region47: #{forward.1} parent=1 // pred_check_branch
      %65 = sbr.rel (0) target = $region49
    $region48: #{forward.1} parent=1 // pred_region
      _
    $region49: #{forward.1} parent=1 // pred_fallthru
      _
    // Predicated region
    $region50: #{forward.1} parent=1 // pred_check
      _
    $region51: #{forward.1} parent=1 // pred_check_branch
      %67 = sbr.rel (0) target = $region53
    $region52: #{forward.1} parent=1 // pred_region
      %68 = dma.done [#allocation3], 4096
    $region53: #{forward.1} parent=1 // pred_fallthru
      _
    // Predicated region
    $region54: #{forward.1} parent=1 // pred_check
      _
    $region55: #{forward.1} parent=1 // pred_check_branch
      %70 = sbr.rel (0) target = $region57
    $region56: #{forward.1} parent=1 // pred_region
      %71 = dma.done [#allocation6], 2048
    $region57: #{forward.1} parent=1 // pred_fallthru
      _
    %v73 = vld [vmem:[%s0] sm:$0xff]
    %v74 = vld [vmem:[%s0 + $0x8] sm:$0xff]
    %v75 = vld [vmem:[%s0 + $0x10] sm:$0xff]
    %v76 = vld [vmem:[%s0 + $0x18] sm:$0xff]
    %v77 = vld [vmem:[%s0 + $0x20] sm:$0x3]
    %v78 = vld [vmem:[%s0 + $0x28] sm:$0x3]
    %v79 = vpack.c.bf16 %v75, %v73
    %v80 = vpack.c.bf16 %v76, %v74
    %v81 = vpack.c.bf16 %v77, %v77
    %v82 = vpack.c.bf16 %v78, %v78
    %v83 = vld [vmem:[#allocation2] sm:$0xff]
    %v84 = vld [vmem:[#allocation2 + $0x8] sm:$0xff]
    %v85 = vld [vmem:[#allocation2 + $0x10] sm:$0xff]
    %v86 = vld [vmem:[#allocation2 + $0x18] sm:$0xff]
    %v87 = vld [vmem:[#allocation2 + $0x20] sm:$0xff]
    %v88 = vld [vmem:[#allocation2 + $0x28] sm:$0xff]
    %v89 = vld [vmem:[#allocation2 + $0x30] sm:$0xff]
    %v90 = vld [vmem:[#allocation2 + $0x38] sm:$0xff]
    %v91 = vld [vmem:[#allocation2 + $0x40] sm:$0xff]
    %v92 = vld [vmem:[#allocation2 + $0x48] sm:$0xff]
    %v93 = vld [vmem:[#allocation2 + $0x50] sm:$0xff]
    %v94 = vld [vmem:[#allocation2 + $0x58] sm:$0xff]
    %v95 = vld [vmem:[#allocation2 + $0x60] sm:$0xff]
    %v96 = vld [vmem:[#allocation2 + $0x68] sm:$0xff]
    %v97 = vld [vmem:[#allocation2 + $0x70] sm:$0xff]
    %v98 = vld [vmem:[#allocation2 + $0x78] sm:$0xff]
    %v99 = vld [vmem:[#allocation2 + $0x80] sm:$0xff]
    %v100 = vld [vmem:[#allocation2 + $0x88] sm:$0xff]
    %v101 = vld [vmem:[#allocation2 + $0x90] sm:$0xff]
    %v102 = vld [vmem:[#allocation2 + $0x98] sm:$0xff]
    %v103 = vld [vmem:[#allocation2 + $0xa0] sm:$0xff]
    %v104 = vld [vmem:[#allocation2 + $0xa8] sm:$0xff]
    %v105 = vld [vmem:[#allocation2 + $0xb0] sm:$0xff]
    %v106 = vld [vmem:[#allocation2 + $0xb8] sm:$0xff]
    %v107 = vld [vmem:[#allocation2 + $0xc0] sm:$0xff]
    %v108 = vld [vmem:[#allocation2 + $0xc8] sm:$0xff]
    %v109 = vld [vmem:[#allocation2 + $0xd0] sm:$0xff]
    %v110 = vld [vmem:[#allocation2 + $0xd8] sm:$0xff]
    %v111 = vld [vmem:[#allocation2 + $0xe0] sm:$0xff]
    %v112 = vld [vmem:[#allocation2 + $0xe8] sm:$0xff]
    %v113 = vld [vmem:[#allocation2 + $0xf0] sm:$0xff]
    %v114 = vld [vmem:[#allocation2 + $0xf8] sm:$0xff]
    %v147 = vunpack.c.l.b16 %v83
    %v148 = vunpack.c.h.b16 %v83
    %v149 = vunpack.c.l.b16 %v84
    %v150 = vunpack.c.h.b16 %v84
    %v151 = vunpack.c.l.b16 %v85
    %v152 = vunpack.c.h.b16 %v85
    %v153 = vunpack.c.l.b16 %v86
    %v154 = vunpack.c.h.b16 %v86
    %v155 = vunpack.c.l.b16 %v87
    %v156 = vunpack.c.h.b16 %v87
    %v157 = vunpack.c.l.b16 %v88
    %v158 = vunpack.c.h.b16 %v88
    %v159 = vunpack.c.l.b16 %v89
    %v160 = vunpack.c.h.b16 %v89
    %v161 = vunpack.c.l.b16 %v90
    %v162 = vunpack.c.h.b16 %v90
    %v163 = vunpack.c.l.b16 %v91
    %v164 = vunpack.c.h.b16 %v91
    %v165 = vunpack.c.l.b16 %v92
    %v166 = vunpack.c.h.b16 %v92
    %v167 = vunpack.c.l.b16 %v93
    %v168 = vunpack.c.h.b16 %v93
    %v169 = vunpack.c.l.b16 %v94
    %v170 = vunpack.c.h.b16 %v94
    %v171 = vunpack.c.l.b16 %v95
    %v172 = vunpack.c.h.b16 %v95
    %v173 = vunpack.c.l.b16 %v96
    %v174 = vunpack.c.h.b16 %v96
    %v175 = vunpack.c.l.b16 %v97
    %v176 = vunpack.c.h.b16 %v97
    %v177 = vunpack.c.l.b16 %v98
    %v178 = vunpack.c.h.b16 %v98
    %v179 = vunpack.c.l.b16 %v99
    %v180 = vunpack.c.h.b16 %v99
    %v181 = vunpack.c.l.b16 %v100
    %v182 = vunpack.c.h.b16 %v100
    %v183 = vunpack.c.l.b16 %v101
    %v184 = vunpack.c.h.b16 %v101
    %v185 = vunpack.c.l.b16 %v102
    %v186 = vunpack.c.h.b16 %v102
    %v187 = vunpack.c.l.b16 %v103
    %v188 = vunpack.c.h.b16 %v103
    %v189 = vunpack.c.l.b16 %v104
    %v190 = vunpack.c.h.b16 %v104
    %v191 = vunpack.c.l.b16 %v105
    %v192 = vunpack.c.h.b16 %v105
    %v193 = vunpack.c.l.b16 %v106
    %v194 = vunpack.c.h.b16 %v106
    %v195 = vunpack.c.l.b16 %v107
    %v196 = vunpack.c.h.b16 %v107
    %v197 = vunpack.c.l.b16 %v108
    %v198 = vunpack.c.h.b16 %v108
    %v199 = vunpack.c.l.b16 %v109
    %v200 = vunpack.c.h.b16 %v109
    %v201 = vunpack.c.l.b16 %v110
    %v202 = vunpack.c.h.b16 %v110
    %v203 = vunpack.c.l.b16 %v111
    %v204 = vunpack.c.h.b16 %v111
    %v205 = vunpack.c.l.b16 %v112
    %v206 = vunpack.c.h.b16 %v112
    %v207 = vunpack.c.l.b16 %v113
    %v208 = vunpack.c.h.b16 %v113
    %v209 = vunpack.c.l.b16 %v114
    %v210 = vunpack.c.h.b16 %v114
    %v211 = vpack.c.b16 %v149, %v147
    %v212 = vpack.c.b16 %v150, %v148
    %v213 = vpack.c.b16 %v153, %v151
    %v214 = vpack.c.b16 %v154, %v152
    %v215 = vpack.c.b16 %v157, %v155
    %v216 = vpack.c.b16 %v158, %v156
    %v217 = vpack.c.b16 %v161, %v159
    %v218 = vpack.c.b16 %v162, %v160
    %v219 = vpack.c.b16 %v165, %v163
    %v220 = vpack.c.b16 %v166, %v164
    %v221 = vpack.c.b16 %v169, %v167
    %v222 = vpack.c.b16 %v170, %v168
    %v223 = vpack.c.b16 %v173, %v171
    %v224 = vpack.c.b16 %v174, %v172
    %v225 = vpack.c.b16 %v177, %v175
    %v226 = vpack.c.b16 %v178, %v176
    %v227 = vpack.c.b16 %v181, %v179
    %v228 = vpack.c.b16 %v182, %v180
    %v229 = vpack.c.b16 %v185, %v183
    %v230 = vpack.c.b16 %v186, %v184
    %v231 = vpack.c.b16 %v189, %v187
    %v232 = vpack.c.b16 %v190, %v188
    %v233 = vpack.c.b16 %v193, %v191
    %v234 = vpack.c.b16 %v194, %v192
    %v235 = vpack.c.b16 %v197, %v195
    %v236 = vpack.c.b16 %v198, %v196
    %v237 = vpack.c.b16 %v201, %v199
    %v238 = vpack.c.b16 %v202, %v200
    %v239 = vpack.c.b16 %v205, %v203
    %v240 = vpack.c.b16 %v206, %v204
    %v241 = vpack.c.b16 %v209, %v207
    %v242 = vpack.c.b16 %v210, %v208
    %275 = vmatprep.subr.bf16.mxu0 %v226
    %276 = vmatpush1.bf16.msra.mxu0 %v225
    %277 = vmatprep.subr.bf16.mxu0 %v224
    %278 = vmatpush1.bf16.msra.mxu0 %v223
    %279 = vmatprep.subr.bf16.mxu0 %v222
    %280 = vmatpush1.bf16.msra.mxu0 %v221
    %281 = vmatprep.subr.bf16.mxu0 %v220
    %282 = vmatpush1.bf16.msra.mxu0 %v219
    %283 = vmatprep.subr.bf16.mxu0 %v218
    %284 = vmatpush1.bf16.msra.mxu0 %v217
    %285 = vmatprep.subr.bf16.mxu0 %v216
    %286 = vmatpush1.bf16.msra.mxu0 %v215
    %287 = vmatprep.subr.bf16.mxu0 %v214
    %288 = vmatpush1.bf16.msra.mxu0 %v213
    %289 = vmatprep.subr.bf16.mxu0 %v212
    %290 = vmatpush1.bf16.msra.mxu0 %v211
    %291 = vmatprep.subr.bf16.mxu0 %v242
    %292 = vmatpush2.bf16.msra.mxu0 %v241
    %293 = vmatprep.subr.bf16.mxu0 %v240
    %294 = vmatpush2.bf16.msra.mxu0 %v239
    %295 = vmatprep.subr.bf16.mxu0 %v238
    %296 = vmatpush2.bf16.msra.mxu0 %v237
    %297 = vmatprep.subr.bf16.mxu0 %v236
    %298 = vmatpush2.bf16.msra.mxu0 %v235
    %299 = vmatprep.subr.bf16.mxu0 %v234
    %300 = vmatpush2.bf16.msra.mxu0 %v233
    %301 = vmatprep.subr.bf16.mxu0 %v232
    %302 = vmatpush2.bf16.msra.mxu0 %v231
    %303 = vmatprep.subr.bf16.mxu0 %v230
    %304 = vmatpush2.bf16.msra.mxu0 %v229
    %305 = vmatprep.subr.bf16.mxu0 %v228
    %306 = vmatpush2.bf16.msra.mxu0 %v227
    %307 = vmatprep.mubr.bf16.mxu0 %v80
    %308 = vmatmul.mubr.bf16.gmra.mxu0 %v79
    %v309 = vpop.f32.mrf.mxu0
    %v310 = vadd.f32 0.0, %v309
    %v311 = vpop.f32.mrf.mxu0
    %v312 = vpop.f32.mrf.mxu0
    %v313 = vadd.f32 0.0, %v312
    %v314 = vpop.f32.mrf.mxu0
    %315 = vmatprep.mubr.bf16.mxu0 %v82
    %316 = vmatmul.mubr.bf16.gmra.mxu0 %v81
    %v317 = vpop.f32.mrf.mxu0
    %v318 = vpop.f32.mrf.mxu0
    %v319 = vadd.f32 0.0, %v318
    %v320 = vpop.f32.mrf.mxu0
    %v321 = vpop.f32.mrf.mxu0
    %322 = vdwg.mxu0
    %v323 = vld [vmem:[%s9] sm:$0x1]
    %v325 = vlaneseq
    %v326 = vshrl.u32 %v325, 7
    %v327 = vsub.s32 0, %v326
    %v328 = vrot.slane %v323, %v327
    %v330 = vadd.f32 %v319, %v328
    %v331 = vmax.f32 %v330, 0.0
    %v332 = vpack.c.bf16 %v331, %v331
    %v333 = vld [vmem:[%s10] sm:$0xf]
    %v334 = vld [vmem:[%s10 + $0x4] sm:$0xf]
    %v335 = vld [vmem:[%s10 + $0x8] sm:$0xf]
    %v336 = vld [vmem:[%s10 + $0xc] sm:$0xf]
    %v337 = vld [vmem:[%s10 + $0x10] sm:$0xf]
    %v338 = vld [vmem:[%s10 + $0x14] sm:$0xf]
    %v339 = vld [vmem:[%s10 + $0x18] sm:$0xf]
    %v340 = vld [vmem:[%s10 + $0x1c] sm:$0xf]
    %v341 = vld [vmem:[%s10 + $0x20] sm:$0xf]
    %v342 = vld [vmem:[%s10 + $0x24] sm:$0xf]
    %v343 = vld [vmem:[%s10 + $0x28] sm:$0xf]
    %v344 = vld [vmem:[%s10 + $0x2c] sm:$0xf]
    %v345 = vld [vmem:[%s10 + $0x30] sm:$0xf]
    %v346 = vld [vmem:[%s10 + $0x34] sm:$0xf]
    %v347 = vld [vmem:[%s10 + $0x38] sm:$0xf]
    %v348 = vld [vmem:[%s10 + $0x3c] sm:$0xf]
    %v349 = vld [vmem:[%s11] sm:$0x1]
    %v351 = vlaneseq
    %v352 = vshrl.u32 %v351, 7
    %v353 = vsub.s32 0, %v352
    %v354 = vrot.slane %v349, %v353
    %v372 = vunpack.c.l.b16 %v333
    %v373 = vunpack.c.l.b16 %v334
    %v374 = vunpack.c.l.b16 %v335
    %v375 = vunpack.c.l.b16 %v336
    %v376 = vunpack.c.l.b16 %v337
    %v377 = vunpack.c.l.b16 %v338
    %v378 = vunpack.c.l.b16 %v339
    %v379 = vunpack.c.l.b16 %v340
    %v380 = vunpack.c.l.b16 %v341
    %v381 = vunpack.c.l.b16 %v342
    %v382 = vunpack.c.l.b16 %v343
    %v383 = vunpack.c.l.b16 %v344
    %v384 = vunpack.c.l.b16 %v345
    %v385 = vunpack.c.l.b16 %v346
    %v386 = vunpack.c.l.b16 %v347
    %v387 = vunpack.c.l.b16 %v348
    %v388 = vpack.c.b16 %v373, %v372
    %v389 = vpack.c.b16 %v375, %v374
    %v390 = vpack.c.b16 %v377, %v376
    %v391 = vpack.c.b16 %v379, %v378
    %v392 = vpack.c.b16 %v381, %v380
    %v393 = vpack.c.b16 %v383, %v382
    %v394 = vpack.c.b16 %v385, %v384
    %v395 = vpack.c.b16 %v387, %v386
    %404 = vmatprep.subr.bf16.mxu0 0
    %405 = vmatpush1.bf16.msra.mxu0 %v395
    %406 = vmatprep.subr.bf16.mxu0 0
    %407 = vmatpush1.bf16.msra.mxu0 %v394
    %408 = vmatprep.subr.bf16.mxu0 0
    %409 = vmatpush1.bf16.msra.mxu0 %v393
    %410 = vmatprep.subr.bf16.mxu0 0
    %411 = vmatpush1.bf16.msra.mxu0 %v392
    %412 = vmatprep.subr.bf16.mxu0 0
    %413 = vmatpush1.bf16.msra.mxu0 %v391
    %414 = vmatprep.subr.bf16.mxu0 0
    %415 = vmatpush1.bf16.msra.mxu0 %v390
    %416 = vmatprep.subr.bf16.mxu0 0
    %417 = vmatpush1.bf16.msra.mxu0 %v389
    %418 = vmatprep.subr.bf16.mxu0 0
    %419 = vmatpush1.bf16.msra.mxu0 %v388
    %420 = vmatprep.subr.bf16.mxu0 0
    %421 = vmatpush2.bf16.msra.mxu0 0
    %422 = vmatprep.subr.bf16.mxu0 0
    %423 = vmatpush2.bf16.msra.mxu0 0
    %424 = vmatprep.subr.bf16.mxu0 0
    %425 = vmatpush2.bf16.msra.mxu0 0
    %426 = vmatprep.subr.bf16.mxu0 0
    %427 = vmatpush2.bf16.msra.mxu0 0
    %428 = vmatprep.subr.bf16.mxu0 0
    %429 = vmatpush2.bf16.msra.mxu0 0
    %430 = vmatprep.subr.bf16.mxu0 0
    %431 = vmatpush2.bf16.msra.mxu0 0
    %432 = vmatprep.subr.bf16.mxu0 0
    %433 = vmatpush2.bf16.msra.mxu0 0
    %434 = vmatprep.subr.bf16.mxu0 0
    %435 = vmatpush2.bf16.msra.mxu0 0
    %436 = vmatprep.mubr.bf16.mxu0 0
    %437 = vmatmul.mubr.bf16.gmra.mxu0 %v332
    %v438 = vpop.f32.mrf.mxu0
    %v439 = vadd.f32 %v354, %v438
    %v440 = vpop.f32.mrf.mxu0
    %v441 = vpop.f32.mrf.mxu0
    %v442 = vpop.f32.mrf.mxu0
    %443 = vdwg.mxu0
    %444 = vst [vmem:[#allocation7] sm:$0x3] %v439
    %v445 = vld [vmem:[%s3] sm:$0x1]
    %v447 = vlaneseq
    %v448 = vshrl.u32 %v447, 7
    %v449 = vsub.s32 0, %v448
    %v450 = vrot.slane %v445, %v449
    %v452 = vld [vmem:[%s4] sm:$0x1]
    %v454 = vlaneseq
    %v455 = vshrl.u32 %v454, 7
    %v456 = vsub.s32 0, %v455
    %v457 = vrot.slane %v452, %v456
    %v459 = vld [vmem:[%s2] sm:$0x1]
    %v461 = vlaneseq
    %v462 = vshrl.u32 %v461, 7
    %v463 = vsub.s32 0, %v462
    %v464 = vrot.slane %v459, %v463
    %v466 = vadd.f32 %v310, %v464
    %v467 = vadd.f32 %v313, %v464
    %v468 = vmul.f32 %v466, %v466
    %v469 = vmul.f32 %v467, %v467
    %470 = vadd.xlane.f32.xlu0 %v466
    %v471 = vpop.xlane.xlu0 %470
    %472 = vadd.xlane.f32.xlu0 %v468
    %v473 = vpop.xlane.xlu0 %472
    %474 = vadd.xlane.f32.xlu0 %v467
    %v475 = vpop.xlane.xlu0 %474
    %476 = vadd.xlane.f32.xlu0 %v469
    %v477 = vpop.xlane.xlu0 %476
    %v478 = vmul.f32 %v471, 0.03125
    %v479 = vmul.f32 %v473, 0.03125
    %v480 = vmul.f32 %v475, 0.03125
    %v481 = vmul.f32 %v477, 0.03125
    %v482 = vmul.f32 %v478, %v478
    %v483 = vmul.f32 %v480, %v480
    %v484 = vsub.f32 %v479, %v482
    %v485 = vsub.f32 %v481, %v483
    %v486 = vmax.f32 %v484, 0.0
    %v487 = vmax.f32 %v485, 0.0
    %v488 = vsub.f32 %v466, %v478
    %v489 = vsub.f32 %v467, %v480
    %v490 = vadd.f32 %v486, 1e-05
    %v491 = vadd.f32 %v487, 1e-05
    %v492 = vrsqrt.pop %v490
    %v493 = vrsqrt.pop %v491
    %v494 = vmul.f32 %v488, %v492
    %v495 = vmul.f32 %v489, %v493
    %v496 = vmul.f32 %v494, %v450
    %v497 = vmul.f32 %v495, %v450
    %v498 = vadd.f32 %v496, %v457
    %v499 = vadd.f32 %v497, %v457
    %v500 = vtanh.pop %v498
    %v501 = vtanh.pop %v499
    %v502 = vld [vmem:[#allocation5] sm:$0xf]
    %v503 = vld [vmem:[#allocation5 + $0x4] sm:$0xf]
    %v504 = vld [vmem:[#allocation5 + $0x8] sm:$0xf]
    %v505 = vld [vmem:[#allocation5 + $0xc] sm:$0xf]
    %v506 = vld [vmem:[#allocation5 + $0x10] sm:$0xf]
    %v507 = vld [vmem:[#allocation5 + $0x14] sm:$0xf]
    %v508 = vld [vmem:[#allocation5 + $0x18] sm:$0xf]
    %v509 = vld [vmem:[#allocation5 + $0x1c] sm:$0xf]
    %v510 = vld [vmem:[#allocation5 + $0x20] sm:$0xf]
    %v511 = vld [vmem:[#allocation5 + $0x24] sm:$0xf]
    %v512 = vld [vmem:[#allocation5 + $0x28] sm:$0xf]
    %v513 = vld [vmem:[#allocation5 + $0x2c] sm:$0xf]
    %v514 = vld [vmem:[#allocation5 + $0x30] sm:$0xf]
    %v515 = vld [vmem:[#allocation5 + $0x34] sm:$0xf]
    %v516 = vld [vmem:[#allocation5 + $0x38] sm:$0xf]
    %v517 = vld [vmem:[#allocation5 + $0x3c] sm:$0xf]
    %v518 = vld [vmem:[#allocation5 + $0x40] sm:$0xf]
    %v519 = vld [vmem:[#allocation5 + $0x44] sm:$0xf]
    %v520 = vld [vmem:[#allocation5 + $0x48] sm:$0xf]
    %v521 = vld [vmem:[#allocation5 + $0x4c] sm:$0xf]
    %v522 = vld [vmem:[#allocation5 + $0x50] sm:$0xf]
    %v523 = vld [vmem:[#allocation5 + $0x54] sm:$0xf]
    %v524 = vld [vmem:[#allocation5 + $0x58] sm:$0xf]
    %v525 = vld [vmem:[#allocation5 + $0x5c] sm:$0xf]
    %v526 = vld [vmem:[#allocation5 + $0x60] sm:$0xf]
    %v527 = vld [vmem:[#allocation5 + $0x64] sm:$0xf]
    %v528 = vld [vmem:[#allocation5 + $0x68] sm:$0xf]
    %v529 = vld [vmem:[#allocation5 + $0x6c] sm:$0xf]
    %v530 = vld [vmem:[#allocation5 + $0x70] sm:$0xf]
    %v531 = vld [vmem:[#allocation5 + $0x74] sm:$0xf]
    %v532 = vld [vmem:[#allocation5 + $0x78] sm:$0xf]
    %v533 = vld [vmem:[#allocation5 + $0x7c] sm:$0xf]
    %v534 = vld [vmem:[%s6] sm:$0x1]
    %v536 = vlaneseq
    %v537 = vshrl.u32 %v536, 7
    %v538 = vsub.s32 0, %v537
    %v539 = vrot.slane %v534, %v538
    %v541 = vld [vmem:[%s7] sm:$0x1]
    %v543 = vlaneseq
    %v544 = vshrl.u32 %v543, 7
    %v545 = vsub.s32 0, %v544
    %v546 = vrot.slane %v541, %v545
    %v548 = vld [vmem:[%s8] sm:$0x1]
    %v550 = vlaneseq
    %v551 = vshrl.u32 %v550, 7
    %v552 = vsub.s32 0, %v551
    %v553 = vrot.slane %v548, %v552
    %v555 = vlaneseq
    %v556 = vshrl.u32 %v555, 7
    %v557 = vsub.s32 7, %v556
    %v558 = vrot.slane %v500, %v557
    %v559 = vlaneseq
    %v560 = vshrl.u32 %v559, 7
    %v561 = vsub.s32 7, %v560
    %v562 = vrot.slane %v501, %v561
    %v563 = vpack.c.bf16 %v501, %v500
    %v564 = vpack.c.bf16 %v562, %v558
    %v597 = vunpack.c.l.b16 %v502
    %v598 = vunpack.c.l.b16 %v503
    %v599 = vunpack.c.l.b16 %v504
    %v600 = vunpack.c.l.b16 %v505
    %v601 = vunpack.c.l.b16 %v506
    %v602 = vunpack.c.l.b16 %v507
    %v603 = vunpack.c.l.b16 %v508
    %v604 = vunpack.c.l.b16 %v509
    %v605 = vunpack.c.l.b16 %v510
    %v606 = vunpack.c.l.b16 %v511
    %v607 = vunpack.c.l.b16 %v512
    %v608 = vunpack.c.l.b16 %v513
    %v609 = vunpack.c.l.b16 %v514
    %v610 = vunpack.c.l.b16 %v515
    %v611 = vunpack.c.l.b16 %v516
    %v612 = vunpack.c.l.b16 %v517
    %v613 = vunpack.c.l.b16 %v518
    %v614 = vunpack.c.l.b16 %v519
    %v615 = vunpack.c.l.b16 %v520
    %v616 = vunpack.c.l.b16 %v521
    %v617 = vunpack.c.l.b16 %v522
    %v618 = vunpack.c.l.b16 %v523
    %v619 = vunpack.c.l.b16 %v524
    %v620 = vunpack.c.l.b16 %v525
    %v621 = vunpack.c.l.b16 %v526
    %v622 = vunpack.c.l.b16 %v527
    %v623 = vunpack.c.l.b16 %v528
    %v624 = vunpack.c.l.b16 %v529
    %v625 = vunpack.c.l.b16 %v530
    %v626 = vunpack.c.l.b16 %v531
    %v627 = vunpack.c.l.b16 %v532
    %v628 = vunpack.c.l.b16 %v533
    %v629 = vpack.c.b16 %v598, %v597
    %v630 = vpack.c.b16 %v600, %v599
    %v631 = vpack.c.b16 %v602, %v601
    %v632 = vpack.c.b16 %v604, %v603
    %v633 = vpack.c.b16 %v606, %v605
    %v634 = vpack.c.b16 %v608, %v607
    %v635 = vpack.c.b16 %v610, %v609
    %v636 = vpack.c.b16 %v612, %v611
    %v637 = vpack.c.b16 %v614, %v613
    %v638 = vpack.c.b16 %v616, %v615
    %v639 = vpack.c.b16 %v618, %v617
    %v640 = vpack.c.b16 %v620, %v619
    %v641 = vpack.c.b16 %v622, %v621
    %v642 = vpack.c.b16 %v624, %v623
    %v643 = vpack.c.b16 %v626, %v625
    %v644 = vpack.c.b16 %v628, %v627
    %661 = vmatprep.subr.bf16.mxu0 0
    %662 = vmatpush1.bf16.msra.mxu0 %v636
    %663 = vmatprep.subr.bf16.mxu0 0
    %664 = vmatpush1.bf16.msra.mxu0 %v635
    %665 = vmatprep.subr.bf16.mxu0 0
    %666 = vmatpush1.bf16.msra.mxu0 %v634
    %667 = vmatprep.subr.bf16.mxu0 0
    %668 = vmatpush1.bf16.msra.mxu0 %v633
    %669 = vmatprep.subr.bf16.mxu0 0
    %670 = vmatpush1.bf16.msra.mxu0 %v632
    %671 = vmatprep.subr.bf16.mxu0 0
    %672 = vmatpush1.bf16.msra.mxu0 %v631
    %673 = vmatprep.subr.bf16.mxu0 0
    %674 = vmatpush1.bf16.msra.mxu0 %v630
    %675 = vmatprep.subr.bf16.mxu0 0
    %676 = vmatpush1.bf16.msra.mxu0 %v629
    %677 = vmatprep.subr.bf16.mxu0 0
    %678 = vmatpush2.bf16.msra.mxu0 %v644
    %679 = vmatprep.subr.bf16.mxu0 0
    %680 = vmatpush2.bf16.msra.mxu0 %v643
    %681 = vmatprep.subr.bf16.mxu0 0
    %682 = vmatpush2.bf16.msra.mxu0 %v642
    %683 = vmatprep.subr.bf16.mxu0 0
    %684 = vmatpush2.bf16.msra.mxu0 %v641
    %685 = vmatprep.subr.bf16.mxu0 0
    %686 = vmatpush2.bf16.msra.mxu0 %v640
    %687 = vmatprep.subr.bf16.mxu0 0
    %688 = vmatpush2.bf16.msra.mxu0 %v639
    %689 = vmatprep.subr.bf16.mxu0 0
    %690 = vmatpush2.bf16.msra.mxu0 %v638
    %691 = vmatprep.subr.bf16.mxu0 0
    %692 = vmatpush2.bf16.msra.mxu0 %v637
    %693 = vmatprep.mubr.bf16.mxu0 %v564
    %694 = vmatmul.mubr.bf16.gmra.mxu0 %v563
    %v695 = vpop.f32.mrf.mxu0
    %v696 = vadd.f32 0.0, %v695
    %v697 = vpop.f32.mrf.mxu0
    %v698 = vpop.f32.mrf.mxu0
    %v699 = vadd.f32 0.0, %v698
    %v700 = vpop.f32.mrf.mxu0
    %701 = vdwg.mxu0
    %v702 = vadd.f32 %v696, %v539
    %v703 = vadd.f32 %v699, %v539
    %v704 = vmul.f32 %v702, %v702
    %v705 = vmul.f32 %v703, %v703
    %706 = vadd.xlane.f32.xlu0 %v702
    %v707 = vpop.xlane.xlu0 %706
    %708 = vadd.xlane.f32.xlu0 %v704
    %v709 = vpop.xlane.xlu0 %708
    %710 = vadd.xlane.f32.xlu0 %v703
    %v711 = vpop.xlane.xlu0 %710
    %712 = vadd.xlane.f32.xlu0 %v705
    %v713 = vpop.xlane.xlu0 %712
    %v714 = vmul.f32 %v707, 0.03125
    %v715 = vmul.f32 %v709, 0.03125
    %v716 = vmul.f32 %v711, 0.03125
    %v717 = vmul.f32 %v713, 0.03125
    %v718 = vmul.f32 %v714, %v714
    %v719 = vmul.f32 %v716, %v716
    %v720 = vsub.f32 %v715, %v718
    %v721 = vsub.f32 %v717, %v719
    %v722 = vmax.f32 %v720, 0.0
    %v723 = vmax.f32 %v721, 0.0
    %v724 = vsub.f32 %v702, %v714
    %v725 = vsub.f32 %v703, %v716
    %v726 = vadd.f32 %v722, 1e-05
    %v727 = vadd.f32 %v723, 1e-05
    %v728 = vrsqrt.pop %v726
    %v729 = vrsqrt.pop %v727
    %v730 = vmul.f32 %v724, %v728
    %v731 = vmul.f32 %v725, %v729
    %v732 = vmul.f32 %v730, %v546
    %v733 = vmul.f32 %v731, %v546
    %v734 = vadd.f32 %v732, %v553
    %v735 = vadd.f32 %v733, %v553
    %v736 = vtanh.pop %v734
    %v737 = vtanh.pop %v735
    %v738 = vlaneseq
    %v739 = vshrl.u32 %v738, 7
    %v740 = vsub.s32 7, %v739
    %v741 = vrot.slane %v736, %v740
    %v742 = vlaneseq
    %v743 = vshrl.u32 %v742, 7
    %v744 = vsub.s32 7, %v743
    %v745 = vrot.slane %v737, %v744
    %v746 = vpack.c.bf16 %v737, %v736
    %v747 = vpack.c.bf16 %v745, %v741
    %748 = vmatprep.subr.bf16.mxu0 0
    %749 = vmatpush1.bf16.msra.mxu0 %v636
    %750 = vmatprep.subr.bf16.mxu0 0
    %751 = vmatpush1.bf16.msra.mxu0 %v635
    %752 = vmatprep.subr.bf16.mxu0 0
    %753 = vmatpush1.bf16.msra.mxu0 %v634
    %754 = vmatprep.subr.bf16.mxu0 0
    %755 = vmatpush1.bf16.msra.mxu0 %v633
    %756 = vmatprep.subr.bf16.mxu0 0
    %757 = vmatpush1.bf16.msra.mxu0 %v632
    %758 = vmatprep.subr.bf16.mxu0 0
    %759 = vmatpush1.bf16.msra.mxu0 %v631
    %760 = vmatprep.subr.bf16.mxu0 0
    %761 = vmatpush1.bf16.msra.mxu0 %v630
    %762 = vmatprep.subr.bf16.mxu0 0
    %763 = vmatpush1.bf16.msra.mxu0 %v629
    %764 = vmatprep.subr.bf16.mxu0 0
    %765 = vmatpush2.bf16.msra.mxu0 %v644
    %766 = vmatprep.subr.bf16.mxu0 0
    %767 = vmatpush2.bf16.msra.mxu0 %v643
    %768 = vmatprep.subr.bf16.mxu0 0
    %769 = vmatpush2.bf16.msra.mxu0 %v642
    %770 = vmatprep.subr.bf16.mxu0 0
    %771 = vmatpush2.bf16.msra.mxu0 %v641
    %772 = vmatprep.subr.bf16.mxu0 0
    %773 = vmatpush2.bf16.msra.mxu0 %v640
    %774 = vmatprep.subr.bf16.mxu0 0
    %775 = vmatpush2.bf16.msra.mxu0 %v639
    %776 = vmatprep.subr.bf16.mxu0 0
    %777 = vmatpush2.bf16.msra.mxu0 %v638
    %778 = vmatprep.subr.bf16.mxu0 0
    %779 = vmatpush2.bf16.msra.mxu0 %v637
    %780 = vmatprep.mubr.bf16.mxu0 %v747
    %781 = vmatmul.mubr.bf16.gmra.mxu0 %v746
    %v782 = vpop.f32.mrf.mxu0
    %v783 = vadd.f32 0.0, %v782
    %v784 = vpop.f32.mrf.mxu0
    %v785 = vpop.f32.mrf.mxu0
    %v786 = vadd.f32 0.0, %v785
    %v787 = vpop.f32.mrf.mxu0
    %788 = vdwg.mxu0
    %v789 = vadd.f32 %v783, %v539
    %v790 = vadd.f32 %v786, %v539
    %v791 = vmul.f32 %v789, %v789
    %v792 = vmul.f32 %v790, %v790
    %793 = vadd.xlane.f32.xlu0 %v789
    %v794 = vpop.xlane.xlu0 %793
    %795 = vadd.xlane.f32.xlu0 %v791
    %v796 = vpop.xlane.xlu0 %795
    %797 = vadd.xlane.f32.xlu0 %v790
    %v798 = vpop.xlane.xlu0 %797
    %799 = vadd.xlane.f32.xlu0 %v792
    %v800 = vpop.xlane.xlu0 %799
    %v801 = vmul.f32 %v794, 0.03125
    %v802 = vmul.f32 %v796, 0.03125
    %v803 = vmul.f32 %v798, 0.03125
    %v804 = vmul.f32 %v800, 0.03125
    %v805 = vmul.f32 %v801, %v801
    %v806 = vmul.f32 %v803, %v803
    %v807 = vsub.f32 %v802, %v805
    %v808 = vsub.f32 %v804, %v806
    %v809 = vmax.f32 %v807, 0.0
    %v810 = vmax.f32 %v808, 0.0
    %v811 = vsub.f32 %v789, %v801
    %v812 = vsub.f32 %v790, %v803
    %v813 = vadd.f32 %v809, 1e-05
    %v814 = vadd.f32 %v810, 1e-05
    %v815 = vrsqrt.pop %v813
    %v816 = vrsqrt.pop %v814
    %v817 = vmul.f32 %v811, %v815
    %v818 = vmul.f32 %v812, %v816
    %v819 = vmul.f32 %v817, %v546
    %v820 = vmul.f32 %v818, %v546
    %v821 = vadd.f32 %v819, %v553
    %v822 = vadd.f32 %v820, %v553
    %v823 = vtanh.pop %v821
    %v824 = vtanh.pop %v822
    %v827 = vrot.slane %v500, 7
    %v828 = vrot.slane %v501, 6
    %vm829 = vcmask 1041409
    %v830 = vsel %vm829, %v828, %v827
    %v834 = vrot.slane %v736, 5
    %v835 = vrot.slane %v737, 4
    %vm836 = vcmask 1043459
    %v837 = vsel %vm836, %v835, %v834
    %v841 = vrot.slane %v823, 3
    %v842 = vrot.slane %v824, 2
    %vm843 = vcmask 1045509
    %v844 = vsel %vm843, %v842, %v841
    %vm846 = vcmask 1041408
    %v847 = vsel %vm846, %v830, %v837
    %vm848 = vcmask 1043456
    %v849 = vsel %vm848, %v847, %v844
    %850 = vst [vmem:[%s13] sm:$0x3f] %v849
    // Predicated region
    $region58: #{forward.1} parent=1 // pred_check
      _
    $region59: #{forward.1} parent=1 // pred_check_branch
      %852 = sbr.rel (0) target = $region61
    $region60: #{forward.1} parent=1 // pred_region
      %s854 = ssub.s32 32, 32
      %855 = vsyncadd [#allocation4], %s854
      %s857 = sshll.u32 [#allocation7], 4
      %s858 = int_to_ptr.vmem [resolvable:$true] %s857
      %860 = dma.vmem_to_hbm [thread:$0]  %s858, 32, %s12, [#allocation4]
    $region61: #{forward.1} parent=1 // pred_fallthru
      _
    // Predicated region
    $region62: #{forward.1} parent=1 // pred_check
      _
    $region63: #{forward.1} parent=1 // pred_check_branch
      %862 = sbr.rel (0) target = $region65
    $region64: #{forward.1} parent=1 // pred_region
      _
    $region65: #{forward.1} parent=1 // pred_fallthru
      _
    // Predicated region
    $region66: #{forward.1} parent=1 // pred_check
      _
    $region67: #{forward.1} parent=1 // pred_check_branch
      %864 = sbr.rel (0) target = $region69
    $region68: #{forward.1} parent=1 // pred_region
      %865 = dma.done [#allocation4], 32
    $region69: #{forward.1} parent=1 // pred_fallthru
      _
    // Predicated region
    $region70: #{forward.1} parent=1 // pred_check
      _
    $region71: #{forward.1} parent=1 // pred_check_branch
      %867 = sbr.rel (0) target = $region73
    $region72: #{forward.1} parent=1 // pred_region
      _
    $region73: #{forward.1} parent=1 // pred_fallthru
      _
    %868 = vsyncpa [#allocation3], 1
    %869 = vsyncpa [#allocation6], 1
    %870 = vsyncpa [#allocation4], 1

</llo_original>
